<compile_context>
chip_gen: v6e
topology: v6e:2x2x1
jax: 0.10.0
libtpu: 0.0.40
codegen_flags: <defaults>
</compile_context>

<pallas_src>
import functools

import jax
import jax.numpy as jnp
from jax.experimental import pallas as pl
from jax.experimental.pallas import tpu as pltpu

EPS = 1e-5  # PyTorch BatchNorm2d default


def _vmem_limit_bytes():
    """Generation-aware VMEM budget (v5e/v6e: 128 MiB, v7x: 64 MiB per TC)."""
    cap = 0
    try:
        info = pltpu.get_tpu_info()
        cap = int(getattr(info, "vmem_capacity_bytes", 0) or 0)
    except Exception:
        cap = 0
    if cap <= 0:
        cap = 64 * 1024 * 1024  # conservative fallback (v7x per-TC VMEM)
    return (cap * 2) // 3       # leave headroom for compiler scratch


def _bottleneck_kernel(x_ref, masks_ref, w1_ref, b1_ref, w2_ref, b2_ref,
                       w3_ref, b3_ref, o_ref, *, W, fuse9):
    f32 = jnp.float32
    x = x_ref[...]                        # (Cin, L), compute dtype
    cdt = x.dtype
    L = x.shape[1]

    # --- conv1 (1x1, BN scale folded into w1) + bias + relu -----------------
    h1 = jnp.dot(w1_ref[...], x, preferred_element_type=f32)
    h1 = jnp.maximum(h1 + b1_ref[...], 0.0)               # (width, L) f32
    h1c = h1.astype(cdt)                                   # single cast

    # Boundary masks live in f32; cast only the small slices used against cdt.
    m_l = masks_ref[0:1, :].astype(cdt)   # dw = -1 tap valid
    m_r = masks_ref[1:2, :].astype(cdt)   # dw = +1 tap valid

    # --- conv2 (3x3, pad=1): kw taps via lane rolls (XLU slot), masked in cdt.
    t_m1 = pltpu.roll(h1c, 1, axis=1) * m_l                # dw = -1 (kw = 0)
    t_p1 = pltpu.roll(h1c, L - 1, axis=1) * m_r            # dw = +1 (kw = 2)
    c3 = jnp.concatenate([t_m1, h1c, t_p1], axis=0)        # (3w, L) cdt

    if fuse9:
        # Pack the 3 row (kh) taps along channels too -> ONE matmul, K = 9w.
        m_t = masks_ref[2:3, :].astype(cdt)                # dh = -1 tap valid
        m_b = masks_ref[3:4, :].astype(cdt)                # dh = +1 tap valid
        c9 = jnp.concatenate(
            [pltpu.roll(c3, W, axis=1) * m_t,              # dh = -1 (kh = 0)
             c3,                                           # dh =  0 (kh = 1)
             pltpu.roll(c3, L - W, axis=1) * m_b],         # dh = +1 (kh = 2)
            axis=0)                                        # (9w, L) cdt
        acc = jnp.dot(w2_ref[...], c9, preferred_element_type=f32)
    else:
        # 3 matmuls with K = 3w; dh masks applied AFTER the matmul (masking
        # columns of the RHS commutes with left-multiplication by the weight).
        m_t = masks_ref[2:3, :]
        m_b = masks_ref[3:4, :]
        acc = jnp.dot(w2_ref[1], c3, preferred_element_type=f32)
        acc = acc + jnp.dot(w2_ref[0], pltpu.roll(c3, W, axis=1),
                            preferred_element_type=f32) * m_t
        acc = acc + jnp.dot(w2_ref[2], pltpu.roll(c3, L - W, axis=1),
                            preferred_element_type=f32) * m_b
    h2 = jnp.maximum(acc + b2_ref[...], 0.0)               # (width, L) f32

    # --- conv3 (1x1, BN folded) + bias ---------------------------------------
    h3 = jnp.dot(w3_ref[...], h2.astype(cdt), preferred_element_type=f32)
    h3 = h3 + b3_ref[...]                                   # (Cout, L) f32

    # --- residual add + relu --------------------------------------------------
    # NOTE: in the bf16 path the residual uses the bf16-rounded x; pass
    # compute_dtype=f32 if bit-exact residuals are required.
    o_ref[...] = jnp.maximum(h3 + x.astype(f32), 0.0).astype(o_ref.dtype)


def bottleneck_pallas(x_nchw, params, compute_dtype=jnp.float32,
                      out_dtype=None, batch_block=None, fuse9=None):
    """x_nchw: (N, C, H, W) f32.  Returns (N, C, H, W) in out_dtype (f32 default)."""
    N, Cin, H, W = x_nchw.shape
    width = params["w1"].shape[0]
    Cout = params["w3"].shape[0]
    assert Cout == Cin, "identity add requires inplanes == planes * expansion"
    assert width % 8 == 0 and Cin % 8 == 0 and Cout % 8 == 0, \
        "channel counts should be sublane (8) multiples to avoid re-layouts"
    HW = H * W
    if out_dtype is None:
        out_dtype = jnp.float32

    # Fuse all 9 taps into one matmul only when K = 3*width underfills the MXU
    # contraction (256 on v6e/v7x; 128 on v5e).
    if fuse9 is None:
        fuse9 = (3 * width) < 256

    # Fold `batch_block` images onto the lane axis per grid step.
    if batch_block is None:
        batch_block = 1
        for d in range(1, N + 1):
            if N % d == 0 and d * HW <= max(HW, 1024):
                batch_block = d
    assert N % batch_block == 0
    b = batch_block
    L = b * HW
    G = N // b
    # TODO(synk): on v7x keep G >= 2 so both TensorCores get parallel work.

    # (N, C, H, W) -> (C, N*H*W): one wrapper transpose; channels on sublanes,
    # a long lane-dense image stream on lanes.
    x_f = jnp.transpose(x_nchw.astype(compute_dtype), (1, 0, 2, 3)
                        ).reshape(Cin, N * HW)

    w1 = params["w1"].astype(compute_dtype)                  # (width, Cin)
    w3 = params["w3"].astype(compute_dtype)                  # (Cout, width)
    w2p3 = params["w2p"]                                      # (3, width, 3w) f32
    if fuse9:
        w2 = jnp.concatenate([w2p3[0], w2p3[1], w2p3[2]],
                             axis=1).astype(compute_dtype)    # (width, 9w)
        w2_spec = pl.BlockSpec((width, 9 * width), lambda g: (0, 0))
    else:
        w2 = w2p3.astype(compute_dtype)                       # (3, width, 3w)
        w2_spec = pl.BlockSpec((3, width, 3 * width), lambda g: (0, 0, 0))
    b1, b2, b3 = params["b1"], params["b2"], params["b3"]     # f32 (C, 1)

    # Boundary-validity masks for one folded (b*HW) lane block.  Periodic in
    # HW, so the same block is reused every grid step; masked positions are
    # exactly where a roll crosses an image boundary (including the boundary
    # between two folded images).
    p = jnp.arange(L, dtype=jnp.int32)
    r = p % HW
    col = r % W
    masks = jnp.stack([
        (col != 0),            # dw = -1 tap valid
        (col != W - 1),        # dw = +1 tap valid
        (r >= W),              # dh = -1 tap valid
        (r < (H - 1) * W),     # dh = +1 tap valid
    ]).astype(jnp.float32)                                    # (4, L)

    kernel = functools.partial(_bottleneck_kernel, W=W, fuse9=fuse9)

    # Constant index maps -> weights/masks stay resident across the grid loop.
    const2d = lambda shape: pl.BlockSpec(shape, lambda g: (0, 0))

    out_flat = pl.pallas_call(
        kernel,
        out_shape=jax.ShapeDtypeStruct((Cout, N * HW), out_dtype),
        grid_spec=pltpu.PrefetchScalarGridSpec(
            num_scalar_prefetch=0,
            grid=(G,),
            in_specs=[
                pl.BlockSpec((Cin, L), lambda g: (0, g)),     # x slab
                const2d((4, L)),                              # masks
                const2d((width, Cin)),                        # w1 (BN folded)
                const2d((width, 1)),                          # b1
                w2_spec,                                       # w2 packed
                const2d((width, 1)),                          # b2
                const2d((Cout, width)),                       # w3 (BN folded)
                const2d((Cout, 1)),                           # b3
            ],
            out_specs=pl.BlockSpec((Cout, L), lambda g: (0, g)),
        ),
        compiler_params=pltpu.CompilerParams(
            dimension_semantics=("parallel",),
            vmem_limit_bytes=_vmem_limit_bytes()),
    )(x_f, masks, w1, b1, w2, b2, w3, b3)

    return jnp.transpose(out_flat.reshape(Cout, N, H, W), (1, 0, 2, 3))


# ---------------------------------------------------------------------------
# Parameter construction (deterministic) + pure-JAX reference for checking.
# ---------------------------------------------------------------------------
def make_params(key, inplanes, planes):
    expansion = 4
    width = planes               # base_width=64, groups=1 -> width = planes
    Cout = planes * expansion
    ks = jax.random.split(key, 6)

    def bn_fold(k, C):
        kg, kb, km, kv = jax.random.split(k, 4)
        gamma = 1.0 + 0.1 * jax.random.normal(kg, (C,), jnp.float32)
        beta = 0.1 * jax.random.normal(kb, (C,), jnp.float32)
        rmean = 0.05 * jax.random.normal(km, (C,), jnp.float32)
        rvar = jnp.abs(1.0 + 0.1 * jax.random.normal(kv, (C,), jnp.float32))
        scale = gamma / jnp.sqrt(rvar + EPS)
        bias = beta - rmean * scale
        return scale, bias

    # PyTorch-layout conv weights (Cout, Cin, kh, kw).
    w1_t = 0.1 * jax.random.normal(ks[0], (width, inplanes, 1, 1), jnp.float32)
    w2_t = 0.1 * jax.random.normal(ks[1], (width, width, 3, 3), jnp.float32)
    w3_t = 0.1 * jax.random.normal(ks[2], (Cout, width, 1, 1), jnp.float32)

    s1, b1 = bn_fold(ks[3], width)
    s2, b2 = bn_fold(ks[4], width)
    s3, b3 = bn_fold(ks[5], Cout)

    # Fold BN scales into the conv weights (out-channel axis = 0).
    w1 = w1_t[:, :, 0, 0] * s1[:, None]                          # (width, Cin)
    w3 = w3_t[:, :, 0, 0] * s3[:, None]                          # (Cout, width)
    # Pack the 3 kw taps per kh along the contraction axis:
    # w2p[kh][:, kw*width:(kw+1)*width] == w2_t[:, :, kh, kw]  -> (3, width, 3*width)
    w2p = jnp.stack(
        [jnp.concatenate([w2_t[:, :, kh, kw] for kw in range(3)], axis=1)
         for kh in range(3)], axis=0) * s2[None, :, None]

    return {
        "w1": w1, "w2p": w2p, "w3": w3,
        "b1": b1[:, None], "b2": b2[:, None], "b3": b3[:, None],
        # unfolded params for the reference implementation
        "s1": s1, "s2": s2, "s3": s3,
        "_w1_t": w1_t, "_w2_t": w2_t, "_w3_t": w3_t,
    }


def bottleneck_reference(x, p):
    """Pure-JAX NCHW reference (lax.conv) matching the PyTorch forward."""
    dn = ("NCHW", "OIHW", "NCHW")

    def conv(x, w, pad):
        return jax.lax.conv_general_dilated(
            x, w, window_strides=(1, 1), padding=pad, dimension_numbers=dn)

    def bn(x, s, b):
        return x * s.reshape(1, -1, 1, 1) + b.reshape(1, -1, 1, 1)

    out = jax.nn.relu(bn(conv(x, p["_w1_t"], "VALID"), p["s1"], p["b1"]))
    out = jax.nn.relu(bn(conv(out, p["_w2_t"], [(1, 1), (1, 1)]), p["s2"], p["b2"]))
    out = bn(conv(out, p["_w3_t"], "VALID"), p["s3"], p["b3"])
    return jax.nn.relu(out + x)


if __name__ == "__main__":
    key = jax.random.PRNGKey(0)
    kx, kp = jax.random.split(key)

    # Bottleneck(inplanes=64, planes=16): width=16, Cout=64; H*W=256.
    N, inplanes, planes, H, W = 2, 64, 16, 16, 16
    x = jax.random.normal(kx, (N, inplanes, H, W), jnp.float32)
    params = make_params(kp, inplanes, planes)

    ref = bottleneck_reference(x, params)

    # f32, auto batch-fold (2 images -> 512 lanes/step) + fused 9-tap conv2.
    out = jax.block_until_ready(bottleneck_pallas(x, params))
    assert out.shape == ref.shape == (N, planes * 4, H, W)
    err = float(jnp.max(jnp.abs(out - ref)))
    assert jnp.allclose(out, ref, atol=2e-4, rtol=2e-4), err

    # f32, no batch fold + 3-matmul conv2 with post-matmul masking (grid > 1).
    out_nf = jax.block_until_ready(
        bottleneck_pallas(x, params, batch_block=1, fuse9=False))
    err_nf = float(jnp.max(jnp.abs(out_nf - ref)))
    assert jnp.allclose(out_nf, ref, atol=2e-4, rtol=2e-4), err_nf

    # bf16 compute + bf16 writeback (f32 MXU accumulation + f32 epilogue).
    out_bf = jax.block_until_ready(
        bottleneck_pallas(x, params, compute_dtype=jnp.bfloat16,
                          out_dtype=jnp.bfloat16))
    err_bf = float(jnp.max(jnp.abs(out_bf.astype(jnp.float32) - ref)))
    assert jnp.allclose(out_bf.astype(jnp.float32), ref,
                        atol=1.5e-1, rtol=5e-2), err_bf

    print("KERNEL_OK")
</pallas_src>

<mosaic_0001>
module attributes {stable_mosaic.version = 11 : i64} {
  func.func @_bottleneck_kernel(%arg0: i32, %arg1: memref<64x512xf32, #tpu.memory_space<vmem>>, %arg2: memref<4x512xf32, #tpu.memory_space<vmem>>, %arg3: memref<16x64xf32, #tpu.memory_space<vmem>>, %arg4: memref<16x1xf32, #tpu.memory_space<vmem>>, %arg5: memref<16x144xf32, #tpu.memory_space<vmem>>, %arg6: memref<16x1xf32, #tpu.memory_space<vmem>>, %arg7: memref<64x16xf32, #tpu.memory_space<vmem>>, %arg8: memref<64x1xf32, #tpu.memory_space<vmem>>, %arg9: memref<64x512xf32, #tpu.memory_space<vmem>>) attributes {dimension_semantics = [#tpu.dimension_semantics<parallel>], iteration_bounds = array<i64: 1>, scalar_prefetch = 0 : i64, scratch_operands = 0 : i64, tpu.core_type = #tpu.core_type<tc>, window_params = [{transform_indices = @transform_0, window_bounds = array<i64: 64, 512>}, {pipeline_mode = #tpu.pipeline_mode<synchronous>, transform_indices = @transform_1, window_bounds = array<i64: 4, 512>}, {pipeline_mode = #tpu.pipeline_mode<synchronous>, transform_indices = @transform_2, window_bounds = array<i64: 16, 64>}, {pipeline_mode = #tpu.pipeline_mode<synchronous>, transform_indices = @transform_3, window_bounds = array<i64: 16, 1>}, {pipeline_mode = #tpu.pipeline_mode<synchronous>, transform_indices = @transform_4, window_bounds = array<i64: 16, 144>}, {pipeline_mode = #tpu.pipeline_mode<synchronous>, transform_indices = @transform_5, window_bounds = array<i64: 16, 1>}, {pipeline_mode = #tpu.pipeline_mode<synchronous>, transform_indices = @transform_6, window_bounds = array<i64: 64, 16>}, {pipeline_mode = #tpu.pipeline_mode<synchronous>, transform_indices = @transform_7, window_bounds = array<i64: 64, 1>}, {transform_indices = @transform_8, window_bounds = array<i64: 64, 512>}]} {
    %c0 = arith.constant 0 : index
    %c0_0 = arith.constant 0 : index
    %0 = vector.load %arg1[%c0, %c0_0] : memref<64x512xf32, #tpu.memory_space<vmem>>, vector<64x512xf32>
    %c0_1 = arith.constant 0 : index
    %c0_2 = arith.constant 0 : index
    %1 = vector.load %arg3[%c0_1, %c0_2] : memref<16x64xf32, #tpu.memory_space<vmem>>, vector<16x64xf32>
    %cst = arith.constant dense<0.000000e+00> : vector<16x512xf32>
    %2 = tpu.matmul %1, %0, %cst {dimension_numbers = #tpu.dot_dimension_numbers<[1], [0], [0], [1], [0, 0, 1, 1], [], []>} : vector<16x64xf32>, vector<64x512xf32>, vector<16x512xf32> -> vector<16x512xf32>
    %c0_3 = arith.constant 0 : index
    %c0_4 = arith.constant 0 : index
    %3 = vector.load %arg4[%c0_3, %c0_4] : memref<16x1xf32, #tpu.memory_space<vmem>>, vector<16x1xf32>
    %4 = vector.broadcast %3 : vector<16x1xf32> to vector<16x512xf32>
    %5 = arith.addf %2, %4 : vector<16x512xf32>
    %cst_5 = arith.constant 0.000000e+00 : f32
    %6 = vector.broadcast %cst_5 : f32 to vector<16x512xf32>
    %7 = arith.maximumf %5, %6 : vector<16x512xf32>
    %c0_6 = arith.constant 0 : index
    %c0_7 = arith.constant 0 : index
    %8 = vector.load %arg2[%c0_6, %c0_7] : memref<4x512xf32, #tpu.memory_space<vmem>>, vector<1x512xf32>
    %c1 = arith.constant 1 : index
    %c0_8 = arith.constant 0 : index
    %9 = vector.load %arg2[%c1, %c0_8] : memref<4x512xf32, #tpu.memory_space<vmem>>, vector<1x512xf32>
    %c1_i32 = arith.constant 1 : i32
    %10 = tpu.dynamic_rotate %7 by %c1_i32 dim 1 : vector<16x512xf32>, i32 -> vector<16x512xf32>
    %11 = vector.broadcast %8 : vector<1x512xf32> to vector<16x512xf32>
    %12 = arith.mulf %10, %11 : vector<16x512xf32>
    %c511_i32 = arith.constant 511 : i32
    %13 = tpu.dynamic_rotate %7 by %c511_i32 dim 1 : vector<16x512xf32>, i32 -> vector<16x512xf32>
    %14 = vector.broadcast %9 : vector<1x512xf32> to vector<16x512xf32>
    %15 = arith.mulf %13, %14 : vector<16x512xf32>
    %16 = tpu.concatenate %12, %7, %15 in 0 : vector<16x512xf32>, vector<16x512xf32>, vector<16x512xf32> -> vector<48x512xf32>
    %c2 = arith.constant 2 : index
    %c0_9 = arith.constant 0 : index
    %17 = vector.load %arg2[%c2, %c0_9] : memref<4x512xf32, #tpu.memory_space<vmem>>, vector<1x512xf32>
    %c3 = arith.constant 3 : index
    %c0_10 = arith.constant 0 : index
    %18 = vector.load %arg2[%c3, %c0_10] : memref<4x512xf32, #tpu.memory_space<vmem>>, vector<1x512xf32>
    %c16_i32 = arith.constant 16 : i32
    %19 = tpu.dynamic_rotate %16 by %c16_i32 dim 1 : vector<48x512xf32>, i32 -> vector<48x512xf32>
    %20 = vector.broadcast %17 : vector<1x512xf32> to vector<48x512xf32>
    %21 = arith.mulf %19, %20 : vector<48x512xf32>
    %c496_i32 = arith.constant 496 : i32
    %22 = tpu.dynamic_rotate %16 by %c496_i32 dim 1 : vector<48x512xf32>, i32 -> vector<48x512xf32>
    %23 = vector.broadcast %18 : vector<1x512xf32> to vector<48x512xf32>
    %24 = arith.mulf %22, %23 : vector<48x512xf32>
    %25 = tpu.concatenate %21, %16, %24 in 0 : vector<48x512xf32>, vector<48x512xf32>, vector<48x512xf32> -> vector<144x512xf32>
    %c0_11 = arith.constant 0 : index
    %c0_12 = arith.constant 0 : index
    %26 = vector.load %arg5[%c0_11, %c0_12] : memref<16x144xf32, #tpu.memory_space<vmem>>, vector<16x144xf32>
    %cst_13 = arith.constant dense<0.000000e+00> : vector<16x512xf32>
    %27 = tpu.matmul %26, %25, %cst_13 {dimension_numbers = #tpu.dot_dimension_numbers<[1], [0], [0], [1], [0, 0, 1, 1], [], []>} : vector<16x144xf32>, vector<144x512xf32>, vector<16x512xf32> -> vector<16x512xf32>
    %c0_14 = arith.constant 0 : index
    %c0_15 = arith.constant 0 : index
    %28 = vector.load %arg6[%c0_14, %c0_15] : memref<16x1xf32, #tpu.memory_space<vmem>>, vector<16x1xf32>
    %29 = vector.broadcast %28 : vector<16x1xf32> to vector<16x512xf32>
    %30 = arith.addf %27, %29 : vector<16x512xf32>
    %cst_16 = arith.constant 0.000000e+00 : f32
    %31 = vector.broadcast %cst_16 : f32 to vector<16x512xf32>
    %32 = arith.maximumf %30, %31 : vector<16x512xf32>
    %c0_17 = arith.constant 0 : index
    %c0_18 = arith.constant 0 : index
    %33 = vector.load %arg7[%c0_17, %c0_18] : memref<64x16xf32, #tpu.memory_space<vmem>>, vector<64x16xf32>
    %cst_19 = arith.constant dense<0.000000e+00> : vector<64x512xf32>
    %34 = tpu.matmul %33, %32, %cst_19 {dimension_numbers = #tpu.dot_dimension_numbers<[1], [0], [0], [1], [0, 0, 1, 1], [], []>} : vector<64x16xf32>, vector<16x512xf32>, vector<64x512xf32> -> vector<64x512xf32>
    %c0_20 = arith.constant 0 : index
    %c0_21 = arith.constant 0 : index
    %35 = vector.load %arg8[%c0_20, %c0_21] : memref<64x1xf32, #tpu.memory_space<vmem>>, vector<64x1xf32>
    %36 = vector.broadcast %35 : vector<64x1xf32> to vector<64x512xf32>
    %37 = arith.addf %34, %36 : vector<64x512xf32>
    %38 = arith.addf %37, %0 : vector<64x512xf32>
    %cst_22 = arith.constant 0.000000e+00 : f32
    %39 = vector.broadcast %cst_22 : f32 to vector<64x512xf32>
    %40 = arith.maximumf %38, %39 : vector<64x512xf32>
    %c0_23 = arith.constant 0 : index
    %c0_24 = arith.constant 0 : index
    %41 = vector.load %arg9[%c0_23, %c0_24] : memref<64x512xf32, #tpu.memory_space<vmem>>, vector<64x512xf32>
    tpu.vector_store %arg9[%c0_23, %c0_24], %40 {strides = array<i32>} : memref<64x512xf32, #tpu.memory_space<vmem>>, vector<64x512xf32>,
    return
  }
  func.func @transform_0(%arg0: i32) -> (i32, i32) {
    %c0_i32 = arith.constant 0 : i32
    %c0_i32_0 = arith.constant 0 : i32
    return %c0_i32, %arg0 : i32, i32
  }
  func.func @transform_1(%arg0: i32) -> (i32, i32) {
    %c0_i32 = arith.constant 0 : i32
    %c0_i32_0 = arith.constant 0 : i32
    %c0_i32_1 = arith.constant 0 : i32
    return %c0_i32, %c0_i32_0 : i32, i32
  }
  func.func @transform_2(%arg0: i32) -> (i32, i32) {
    %c0_i32 = arith.constant 0 : i32
    %c0_i32_0 = arith.constant 0 : i32
    %c0_i32_1 = arith.constant 0 : i32
    return %c0_i32, %c0_i32_0 : i32, i32
  }
  func.func @transform_3(%arg0: i32) -> (i32, i32) {
    %c0_i32 = arith.constant 0 : i32
    %c0_i32_0 = arith.constant 0 : i32
    %c0_i32_1 = arith.constant 0 : i32
    return %c0_i32, %c0_i32_0 : i32, i32
  }
  func.func @transform_4(%arg0: i32) -> (i32, i32) {
    %c0_i32 = arith.constant 0 : i32
    %c0_i32_0 = arith.constant 0 : i32
    %c0_i32_1 = arith.constant 0 : i32
    return %c0_i32, %c0_i32_0 : i32, i32
  }
  func.func @transform_5(%arg0: i32) -> (i32, i32) {
    %c0_i32 = arith.constant 0 : i32
    %c0_i32_0 = arith.constant 0 : i32
    %c0_i32_1 = arith.constant 0 : i32
    return %c0_i32, %c0_i32_0 : i32, i32
  }
  func.func @transform_6(%arg0: i32) -> (i32, i32) {
    %c0_i32 = arith.constant 0 : i32
    %c0_i32_0 = arith.constant 0 : i32
    %c0_i32_1 = arith.constant 0 : i32
    return %c0_i32, %c0_i32_0 : i32, i32
  }
  func.func @transform_7(%arg0: i32) -> (i32, i32) {
    %c0_i32 = arith.constant 0 : i32
    %c0_i32_0 = arith.constant 0 : i32
    %c0_i32_1 = arith.constant 0 : i32
    return %c0_i32, %c0_i32_0 : i32, i32
  }
  func.func @transform_8(%arg0: i32) -> (i32, i32) {
    %c0_i32 = arith.constant 0 : i32
    %c0_i32_0 = arith.constant 0 : i32
    return %c0_i32, %arg0 : i32, i32
  }
}

</mosaic_0001>

<llo_original>
// kernel: tpu_custom_call.1
$region0: #{tpu_custom_call.1}
  #allocation0 [shape = 'u32[]', space=smem, size = 0x4, offset = 0x4, fixed_abs, tag = 'smem constant byte address 0x4 - core index']
  #allocation1 [shape = 'u32[144,128]{1,0:T(1,128)}', space=vmem, size = 0x12000, scoped, tag = 'internal scratch']
  %s0 = inlined_call_operand.hbm [shape: f32[64,512], index: 0, kind: input, shape index: {}]
  %s1 = inlined_call_operand.vmem [shape: f32[4,512], index: 1, kind: input, shape index: {}]
  %s2 = inlined_call_operand.vmem [shape: f32[16,64], index: 2, kind: input, shape index: {}]
  %s3 = inlined_call_operand.vmem [shape: f32[16,1], index: 3, kind: input, shape index: {}]
  %s4 = inlined_call_operand.vmem [shape: f32[16,144], index: 4, kind: input, shape index: {}]
  %s5 = inlined_call_operand.vmem [shape: f32[16,1], index: 5, kind: input, shape index: {}]
  %s6 = inlined_call_operand.vmem [shape: f32[64,16], index: 6, kind: input, shape index: {}]
  %s7 = inlined_call_operand.vmem [shape: f32[64,1], index: 7, kind: input, shape index: {}]
  %s8 = inlined_call_operand.hbm [shape: f32[64,512], index: 8, kind: output, shape index: {}]
  %s9 = sld [smem:[#allocation0]]
  $region46: #{tpu_custom_call.1} parent=0
    _
  %s11 = ssub.s32 1, %s9
  %s12 = scalar_select 0, %s11, %s9
  $region1: #{tpu_custom_call.1} parent=0
    #allocation2 [shape = 'u8[131072]{0}', space=vmem, size = 0x20000, scoped, tag = 'input window, operand 0, single buffered']
    #allocation3 [shape = 's32[1]{0}', space=sflag, size = 0x4, scoped, tag = 'scoped memory for tpu_custom_call.1']
    #allocation4 [shape = 's32[1]{0}', space=sflag, size = 0x4, scoped, tag = 'scoped memory for tpu_custom_call.1']
    #allocation5 [shape = 'u8[131072]{0}', space=vmem, size = 0x20000, scoped, tag = 'output window, operand 0, single buffered']
    %13 = vsyncpa [#allocation3], 0
    %14 = vsyncpa [#allocation4], 0
    // Predicated region
    $region2: #{tpu_custom_call.1} parent=1 // pred_check
      _
    $region3: #{tpu_custom_call.1} parent=1 // pred_check_branch
      %16 = sbr.rel (0) target = $region5
    $region4: #{tpu_custom_call.1} parent=1 // pred_region
      %s18 = ssub.s32 4096, 4096
      %19 = vsyncadd [#allocation3], %s18
      %s20 = sshll.u32 [#allocation2], 4
      %s21 = int_to_ptr.vmem [resolvable:$true] %s20
      %26 = dma.hbm_to_vmem [thread:$0]  %s0, 4096, %s21, [#allocation3], 512, 512, 32
    $region5: #{tpu_custom_call.1} parent=1 // pred_fallthru
      _
    // Predicated region
    $region6: #{tpu_custom_call.1} parent=1 // pred_check
      _
    $region7: #{tpu_custom_call.1} parent=1 // pred_check_branch
      %28 = sbr.rel (0) target = $region9
    $region8: #{tpu_custom_call.1} parent=1 // pred_region
      _
    $region9: #{tpu_custom_call.1} parent=1 // pred_fallthru
      _
    // Predicated region
    $region10: #{tpu_custom_call.1} parent=1 // pred_check
      _
    $region11: #{tpu_custom_call.1} parent=1 // pred_check_branch
      %30 = sbr.rel (0) target = $region13
    $region12: #{tpu_custom_call.1} parent=1 // pred_region
      _
    $region13: #{tpu_custom_call.1} parent=1 // pred_fallthru
      _
    // Predicated region
    $region14: #{tpu_custom_call.1} parent=1 // pred_check
      _
    $region15: #{tpu_custom_call.1} parent=1 // pred_check_branch
      %32 = sbr.rel (0) target = $region17
    $region16: #{tpu_custom_call.1} parent=1 // pred_region
      _
    $region17: #{tpu_custom_call.1} parent=1 // pred_fallthru
      _
    // Predicated region
    $region18: #{tpu_custom_call.1} parent=1 // pred_check
      _
    $region19: #{tpu_custom_call.1} parent=1 // pred_check_branch
      %34 = sbr.rel (0) target = $region21
    $region20: #{tpu_custom_call.1} parent=1 // pred_region
      _
    $region21: #{tpu_custom_call.1} parent=1 // pred_fallthru
      _
    // Predicated region
    $region22: #{tpu_custom_call.1} parent=1 // pred_check
      _
    $region23: #{tpu_custom_call.1} parent=1 // pred_check_branch
      %36 = sbr.rel (0) target = $region25
    $region24: #{tpu_custom_call.1} parent=1 // pred_region
      _
    $region25: #{tpu_custom_call.1} parent=1 // pred_fallthru
      _
    // Predicated region
    $region26: #{tpu_custom_call.1} parent=1 // pred_check
      _
    $region27: #{tpu_custom_call.1} parent=1 // pred_check_branch
      %38 = sbr.rel (0) target = $region29
    $region28: #{tpu_custom_call.1} parent=1 // pred_region
      _
    $region29: #{tpu_custom_call.1} parent=1 // pred_fallthru
      _
    // Predicated region
    $region30: #{tpu_custom_call.1} parent=1 // pred_check
      _
    $region31: #{tpu_custom_call.1} parent=1 // pred_check_branch
      %40 = sbr.rel (0) target = $region33
    $region32: #{tpu_custom_call.1} parent=1 // pred_region
      _
    $region33: #{tpu_custom_call.1} parent=1 // pred_fallthru
      _
    // Predicated region
    $region34: #{tpu_custom_call.1} parent=1 // pred_check
      _
    $region35: #{tpu_custom_call.1} parent=1 // pred_check_branch
      %42 = sbr.rel (0) target = $region37
    $region36: #{tpu_custom_call.1} parent=1 // pred_region
      %43 = dma.done [#allocation3], 4096
    $region37: #{tpu_custom_call.1} parent=1 // pred_fallthru
      _
    %v44 = vld [vmem:[#allocation2] sm:$0xff]
    %v45 = vld [vmem:[#allocation2 + $0x8] sm:$0xff]
    %v46 = vld [vmem:[#allocation2 + $0x10] sm:$0xff]
    %v47 = vld [vmem:[#allocation2 + $0x18] sm:$0xff]
    %v48 = vld [vmem:[#allocation2 + $0x20] sm:$0xff]
    %v49 = vld [vmem:[#allocation2 + $0x28] sm:$0xff]
    %v50 = vld [vmem:[#allocation2 + $0x30] sm:$0xff]
    %v51 = vld [vmem:[#allocation2 + $0x38] sm:$0xff]
    %v52 = vld [vmem:[#allocation2 + $0x40] sm:$0xff]
    %v53 = vld [vmem:[#allocation2 + $0x48] sm:$0xff]
    %v54 = vld [vmem:[#allocation2 + $0x50] sm:$0xff]
    %v55 = vld [vmem:[#allocation2 + $0x58] sm:$0xff]
    %v56 = vld [vmem:[#allocation2 + $0x60] sm:$0xff]
    %v57 = vld [vmem:[#allocation2 + $0x68] sm:$0xff]
    %v58 = vld [vmem:[#allocation2 + $0x70] sm:$0xff]
    %v59 = vld [vmem:[#allocation2 + $0x78] sm:$0xff]
    %v60 = vld [vmem:[#allocation2 + $0x80] sm:$0xff]
    %v61 = vld [vmem:[#allocation2 + $0x88] sm:$0xff]
    %v62 = vld [vmem:[#allocation2 + $0x90] sm:$0xff]
    %v63 = vld [vmem:[#allocation2 + $0x98] sm:$0xff]
    %v64 = vld [vmem:[#allocation2 + $0xa0] sm:$0xff]
    %v65 = vld [vmem:[#allocation2 + $0xa8] sm:$0xff]
    %v66 = vld [vmem:[#allocation2 + $0xb0] sm:$0xff]
    %v67 = vld [vmem:[#allocation2 + $0xb8] sm:$0xff]
    %v68 = vld [vmem:[#allocation2 + $0xc0] sm:$0xff]
    %v69 = vld [vmem:[#allocation2 + $0xc8] sm:$0xff]
    %v70 = vld [vmem:[#allocation2 + $0xd0] sm:$0xff]
    %v71 = vld [vmem:[#allocation2 + $0xd8] sm:$0xff]
    %v72 = vld [vmem:[#allocation2 + $0xe0] sm:$0xff]
    %v73 = vld [vmem:[#allocation2 + $0xe8] sm:$0xff]
    %v74 = vld [vmem:[#allocation2 + $0xf0] sm:$0xff]
    %v75 = vld [vmem:[#allocation2 + $0xf8] sm:$0xff]
    %v76 = vld [vmem:[%s2] sm:$0xff]
    %v77 = vld [vmem:[%s2 + $0x8] sm:$0xff]
    %v78 = vld [vmem:[%s3] sm:$0xff]
    %v79 = vld [vmem:[%s3 + $0x8] sm:$0xff]
    %81 = vset.pattern.permute.xlu0 0
    %82 = vperm.xlu0 %81, %v78
    %v83 = vpop.permute.xlu0 %82
    %86 = vset.pattern.permute.xlu0 0
    %87 = vperm.xlu0 %86, %v79
    %v88 = vpop.permute.xlu0 %87
    %vm90 = vcmask 523264
    %v92 = vsel %vm90, %v76, 0
    %v95 = vsel %vm90, %v77, 0
    %97 = vmatprep.subr.mxu0 0.0
    %98 = vmatpush1.msra.mxu0 0.0
    %99 = vmatprep.subr.mxu0 0.0
    %100 = vmatpush1.msra.mxu0 0.0
    %101 = vmatprep.subr.mxu0 0.0
    %102 = vmatpush1.msra.mxu0 0.0
    %103 = vmatprep.subr.mxu0 0.0
    %104 = vmatpush1.msra.mxu0 0.0
    %105 = vmatprep.subr.mxu0 0.0
    %106 = vmatpush1.msra.mxu0 0.0
    %107 = vmatprep.subr.mxu0 0.0
    %108 = vmatpush1.msra.mxu0 0.0
    %109 = vmatprep.subr.mxu0 0.0
    %110 = vmatpush1.msra.mxu0 0.0
    %111 = vmatprep.subr.mxu0 0.0
    %112 = vmatpush1.msra.mxu0 0.0
    %113 = vmatprep.subr.mxu0 %v73
    %114 = vmatpush1.msra.mxu0 %v72
    %115 = vmatprep.subr.mxu0 %v69
    %116 = vmatpush1.msra.mxu0 %v68
    %117 = vmatprep.subr.mxu0 %v65
    %118 = vmatpush1.msra.mxu0 %v64
    %119 = vmatprep.subr.mxu0 %v61
    %120 = vmatpush1.msra.mxu0 %v60
    %121 = vmatprep.subr.mxu0 %v57
    %122 = vmatpush1.msra.mxu0 %v56
    %123 = vmatprep.subr.mxu0 %v53
    %124 = vmatpush1.msra.mxu0 %v52
    %125 = vmatprep.subr.mxu0 %v49
    %126 = vmatpush1.msra.mxu0 %v48
    %127 = vmatprep.subr.mxu0 %v45
    %128 = vmatpush1.msra.mxu0 %v44
    %129 = vmatprep.subr.mxu0 0.0
    %130 = vmatpush2.msra.mxu0 0.0
    %131 = vmatprep.subr.mxu0 0.0
    %132 = vmatpush2.msra.mxu0 0.0
    %133 = vmatprep.subr.mxu0 0.0
    %134 = vmatpush2.msra.mxu0 0.0
    %135 = vmatprep.subr.mxu0 0.0
    %136 = vmatpush2.msra.mxu0 0.0
    %137 = vmatprep.subr.mxu0 0.0
    %138 = vmatpush2.msra.mxu0 0.0
    %139 = vmatprep.subr.mxu0 0.0
    %140 = vmatpush2.msra.mxu0 0.0
    %141 = vmatprep.subr.mxu0 0.0
    %142 = vmatpush2.msra.mxu0 0.0
    %143 = vmatprep.subr.mxu0 0.0
    %144 = vmatpush2.msra.mxu0 0.0
    %145 = vmatprep.subr.mxu0 0.0
    %146 = vmatpush2.msra.mxu0 0.0
    %147 = vmatprep.subr.mxu0 0.0
    %148 = vmatpush2.msra.mxu0 0.0
    %149 = vmatprep.subr.mxu0 0.0
    %150 = vmatpush2.msra.mxu0 0.0
    %151 = vmatprep.subr.mxu0 0.0
    %152 = vmatpush2.msra.mxu0 0.0
    %153 = vmatprep.subr.mxu0 0.0
    %154 = vmatpush2.msra.mxu0 0.0
    %155 = vmatprep.subr.mxu0 0.0
    %156 = vmatpush2.msra.mxu0 0.0
    %157 = vmatprep.subr.mxu0 0.0
    %158 = vmatpush2.msra.mxu0 0.0
    %159 = vmatprep.subr.mxu0 0.0
    %160 = vmatpush2.msra.mxu0 0.0
    %161 = vmatprep.mubr.f32.mxu0 0.0
    %162 = vmatmul.mubr.f32.gmra.mxu0 %v92
    %v163 = vpop.f32.mrf.mxu0
    %v164 = vadd.f32 %v83, %v163
    %v165 = vpop.f32.mrf.mxu0
    %v166 = vadd.f32 %v83, %v165
    %167 = vmatprep.mubr.f32.mxu0 0.0
    %168 = vmatmul.mubr.f32.gmra.mxu0 %v95
    %v169 = vpop.f32.mrf.mxu0
    %v170 = vadd.f32 %v88, %v169
    %v171 = vpop.f32.mrf.mxu0
    %v172 = vadd.f32 %v88, %v171
    %173 = vdwg.mxu0
    %174 = vmatprep.subr.mxu0 0.0
    %175 = vmatpush1.msra.mxu0 0.0
    %176 = vmatprep.subr.mxu0 0.0
    %177 = vmatpush1.msra.mxu0 0.0
    %178 = vmatprep.subr.mxu0 0.0
    %179 = vmatpush1.msra.mxu0 0.0
    %180 = vmatprep.subr.mxu0 0.0
    %181 = vmatpush1.msra.mxu0 0.0
    %182 = vmatprep.subr.mxu0 0.0
    %183 = vmatpush1.msra.mxu0 0.0
    %184 = vmatprep.subr.mxu0 0.0
    %185 = vmatpush1.msra.mxu0 0.0
    %186 = vmatprep.subr.mxu0 0.0
    %187 = vmatpush1.msra.mxu0 0.0
    %188 = vmatprep.subr.mxu0 0.0
    %189 = vmatpush1.msra.mxu0 0.0
    %190 = vmatprep.subr.mxu0 %v75
    %191 = vmatpush1.msra.mxu0 %v74
    %192 = vmatprep.subr.mxu0 %v71
    %193 = vmatpush1.msra.mxu0 %v70
    %194 = vmatprep.subr.mxu0 %v67
    %195 = vmatpush1.msra.mxu0 %v66
    %196 = vmatprep.subr.mxu0 %v63
    %197 = vmatpush1.msra.mxu0 %v62
    %198 = vmatprep.subr.mxu0 %v59
    %199 = vmatpush1.msra.mxu0 %v58
    %200 = vmatprep.subr.mxu0 %v55
    %201 = vmatpush1.msra.mxu0 %v54
    %202 = vmatprep.subr.mxu0 %v51
    %203 = vmatpush1.msra.mxu0 %v50
    %204 = vmatprep.subr.mxu0 %v47
    %205 = vmatpush1.msra.mxu0 %v46
    %206 = vmatprep.subr.mxu0 0.0
    %207 = vmatpush2.msra.mxu0 0.0
    %208 = vmatprep.subr.mxu0 0.0
    %209 = vmatpush2.msra.mxu0 0.0
    %210 = vmatprep.subr.mxu0 0.0
    %211 = vmatpush2.msra.mxu0 0.0
    %212 = vmatprep.subr.mxu0 0.0
    %213 = vmatpush2.msra.mxu0 0.0
    %214 = vmatprep.subr.mxu0 0.0
    %215 = vmatpush2.msra.mxu0 0.0
    %216 = vmatprep.subr.mxu0 0.0
    %217 = vmatpush2.msra.mxu0 0.0
    %218 = vmatprep.subr.mxu0 0.0
    %219 = vmatpush2.msra.mxu0 0.0
    %220 = vmatprep.subr.mxu0 0.0
    %221 = vmatpush2.msra.mxu0 0.0
    %222 = vmatprep.subr.mxu0 0.0
    %223 = vmatpush2.msra.mxu0 0.0
    %224 = vmatprep.subr.mxu0 0.0
    %225 = vmatpush2.msra.mxu0 0.0
    %226 = vmatprep.subr.mxu0 0.0
    %227 = vmatpush2.msra.mxu0 0.0
    %228 = vmatprep.subr.mxu0 0.0
    %229 = vmatpush2.msra.mxu0 0.0
    %230 = vmatprep.subr.mxu0 0.0
    %231 = vmatpush2.msra.mxu0 0.0
    %232 = vmatprep.subr.mxu0 0.0
    %233 = vmatpush2.msra.mxu0 0.0
    %234 = vmatprep.subr.mxu0 0.0
    %235 = vmatpush2.msra.mxu0 0.0
    %236 = vmatprep.subr.mxu0 0.0
    %237 = vmatpush2.msra.mxu0 0.0
    %238 = vmatprep.mubr.f32.mxu0 0.0
    %239 = vmatmul.mubr.f32.gmra.mxu0 %v92
    %v240 = vpop.f32.mrf.mxu0
    %v241 = vadd.f32 %v83, %v240
    %v242 = vpop.f32.mrf.mxu0
    %v243 = vadd.f32 %v83, %v242
    %244 = vmatprep.mubr.f32.mxu0 0.0
    %245 = vmatmul.mubr.f32.gmra.mxu0 %v95
    %v246 = vpop.f32.mrf.mxu0
    %v247 = vadd.f32 %v88, %v246
    %v248 = vpop.f32.mrf.mxu0
    %v249 = vadd.f32 %v88, %v248
    %250 = vdwg.mxu0
    %v251 = vmax.f32 %v164, 0.0
    %v252 = vmax.f32 %v166, 0.0
    %v253 = vmax.f32 %v241, 0.0
    %v254 = vmax.f32 %v243, 0.0
    %v255 = vmax.f32 %v170, 0.0
    %v256 = vmax.f32 %v172, 0.0
    %v257 = vmax.f32 %v247, 0.0
    %v258 = vmax.f32 %v249, 0.0
    %v259 = vld [vmem:[%s1] ss:$4 sm:$0xf]
    %s260 = scalar_lea.vmem %s1, 1
    %v261 = vld [vmem:[%s260] ss:$4 sm:$0xf]
    %262 = vrot.lane.b32.xlu0 %v251, 1
    %v263 = vpop.permute.xlu0 %262
    %264 = vrot.lane.b32.xlu0 %v255, 1
    %v265 = vpop.permute.xlu0 %264
    %266 = vrot.lane.b32.xlu0 %v252, 1
    %v267 = vpop.permute.xlu0 %266
    %268 = vrot.lane.b32.xlu0 %v256, 1
    %v269 = vpop.permute.xlu0 %268
    %270 = vrot.lane.b32.xlu0 %v253, 1
    %v271 = vpop.permute.xlu0 %270
    %272 = vrot.lane.b32.xlu0 %v257, 1
    %v273 = vpop.permute.xlu0 %272
    %274 = vrot.lane.b32.xlu0 %v254, 1
    %v275 = vpop.permute.xlu0 %274
    %276 = vrot.lane.b32.xlu0 %v258, 1
    %v277 = vpop.permute.xlu0 %276
    %v278 = vlaneseq
    %v279 = vand.u32 %v278, 127
    %vm280 = vcmp.lt.s32.totalorder %v279, 1
    %v281 = vsel %vm280, %v271, %v275
    %v282 = vsel %vm280, %v273, %v277
    %v283 = vsel %vm280, %v267, %v271
    %v284 = vsel %vm280, %v269, %v273
    %v285 = vsel %vm280, %v263, %v267
    %v286 = vsel %vm280, %v265, %v269
    %v287 = vsel %vm280, %v275, %v263
    %v288 = vsel %vm280, %v277, %v265
    %v290 = vlaneseq
    %v291 = vshrl.u32 %v290, 7
    %v292 = vsub.s32 0, %v291
    %v293 = vrot.slane %v259, %v292
    %v294 = vlaneseq
    %v295 = vshrl.u32 %v294, 7
    %v296 = vsub.s32 1, %v295
    %v297 = vrot.slane %v259, %v296
    %v298 = vlaneseq
    %v299 = vshrl.u32 %v298, 7
    %v300 = vsub.s32 2, %v299
    %v301 = vrot.slane %v259, %v300
    %v302 = vlaneseq
    %v303 = vshrl.u32 %v302, 7
    %v304 = vsub.s32 3, %v303
    %v305 = vrot.slane %v259, %v304
    %v310 = vmul.f32 %v287, %v293
    %v311 = vmul.f32 %v285, %v297
    %v312 = vmul.f32 %v283, %v301
    %v313 = vmul.f32 %v281, %v305
    %v314 = vmul.f32 %v288, %v293
    %v315 = vmul.f32 %v286, %v297
    %v316 = vmul.f32 %v284, %v301
    %v317 = vmul.f32 %v282, %v305
    %318 = vrot.lane.b32.xlu0 %v251, 127
    %v319 = vpop.permute.xlu0 %318
    %320 = vrot.lane.b32.xlu0 %v255, 127
    %v321 = vpop.permute.xlu0 %320
    %322 = vrot.lane.b32.xlu0 %v252, 127
    %v323 = vpop.permute.xlu0 %322
    %324 = vrot.lane.b32.xlu0 %v256, 127
    %v325 = vpop.permute.xlu0 %324
    %326 = vrot.lane.b32.xlu0 %v253, 127
    %v327 = vpop.permute.xlu0 %326
    %328 = vrot.lane.b32.xlu0 %v257, 127
    %v329 = vpop.permute.xlu0 %328
    %330 = vrot.lane.b32.xlu0 %v254, 127
    %v331 = vpop.permute.xlu0 %330
    %332 = vrot.lane.b32.xlu0 %v258, 127
    %v333 = vpop.permute.xlu0 %332
    %vm334 = vcmp.lt.s32.totalorder %v279, 127
    %v335 = vsel %vm334, %v327, %v331
    %v336 = vsel %vm334, %v329, %v333
    %v337 = vsel %vm334, %v323, %v327
    %v338 = vsel %vm334, %v325, %v329
    %v339 = vsel %vm334, %v319, %v323
    %v340 = vsel %vm334, %v321, %v325
    %v341 = vsel %vm334, %v331, %v319
    %v342 = vsel %vm334, %v333, %v321
    %v344 = vlaneseq
    %v345 = vshrl.u32 %v344, 7
    %v346 = vsub.s32 0, %v345
    %v347 = vrot.slane %v261, %v346
    %v348 = vlaneseq
    %v349 = vshrl.u32 %v348, 7
    %v350 = vsub.s32 1, %v349
    %v351 = vrot.slane %v261, %v350
    %v352 = vlaneseq
    %v353 = vshrl.u32 %v352, 7
    %v354 = vsub.s32 2, %v353
    %v355 = vrot.slane %v261, %v354
    %v356 = vlaneseq
    %v357 = vshrl.u32 %v356, 7
    %v358 = vsub.s32 3, %v357
    %v359 = vrot.slane %v261, %v358
    %v364 = vmul.f32 %v339, %v347
    %v365 = vmul.f32 %v337, %v351
    %v366 = vmul.f32 %v335, %v355
    %v367 = vmul.f32 %v341, %v359
    %v368 = vmul.f32 %v340, %v347
    %v369 = vmul.f32 %v338, %v351
    %v370 = vmul.f32 %v336, %v355
    %v371 = vmul.f32 %v342, %v359
    %s372 = scalar_lea.vmem %s1, 2
    %v373 = vld [vmem:[%s372] ss:$4 sm:$0xf]
    %s374 = scalar_lea.vmem %s1, 3
    %v375 = vld [vmem:[%s374] ss:$4 sm:$0xf]
    %376 = vrot.lane.b32.xlu0 %v310, 16
    %v377 = vpop.permute.xlu0 %376
    %378 = vrot.lane.b32.xlu0 %v314, 16
    %v379 = vpop.permute.xlu0 %378
    %380 = vrot.lane.b32.xlu0 %v251, 16
    %v381 = vpop.permute.xlu0 %380
    %382 = vrot.lane.b32.xlu0 %v255, 16
    %v383 = vpop.permute.xlu0 %382
    %384 = vrot.lane.b32.xlu0 %v364, 16
    %v385 = vpop.permute.xlu0 %384
    %386 = vrot.lane.b32.xlu0 %v368, 16
    %v387 = vpop.permute.xlu0 %386
    %388 = vrot.lane.b32.xlu0 %v311, 16
    %v389 = vpop.permute.xlu0 %388
    %390 = vrot.lane.b32.xlu0 %v315, 16
    %v391 = vpop.permute.xlu0 %390
    %392 = vrot.lane.b32.xlu0 %v252, 16
    %v393 = vpop.permute.xlu0 %392
    %394 = vrot.lane.b32.xlu0 %v256, 16
    %v395 = vpop.permute.xlu0 %394
    %396 = vrot.lane.b32.xlu0 %v365, 16
    %v397 = vpop.permute.xlu0 %396
    %398 = vrot.lane.b32.xlu0 %v369, 16
    %v399 = vpop.permute.xlu0 %398
    %400 = vrot.lane.b32.xlu0 %v312, 16
    %v401 = vpop.permute.xlu0 %400
    %402 = vrot.lane.b32.xlu0 %v316, 16
    %v403 = vpop.permute.xlu0 %402
    %404 = vrot.lane.b32.xlu0 %v253, 16
    %v405 = vpop.permute.xlu0 %404
    %406 = vrot.lane.b32.xlu0 %v257, 16
    %v407 = vpop.permute.xlu0 %406
    %408 = vrot.lane.b32.xlu0 %v366, 16
    %v409 = vpop.permute.xlu0 %408
    %410 = vrot.lane.b32.xlu0 %v370, 16
    %v411 = vpop.permute.xlu0 %410
    %412 = vrot.lane.b32.xlu0 %v313, 16
    %v413 = vpop.permute.xlu0 %412
    %414 = vrot.lane.b32.xlu0 %v317, 16
    %v415 = vpop.permute.xlu0 %414
    %416 = vrot.lane.b32.xlu0 %v254, 16
    %v417 = vpop.permute.xlu0 %416
    %418 = vrot.lane.b32.xlu0 %v258, 16
    %v419 = vpop.permute.xlu0 %418
    %420 = vrot.lane.b32.xlu0 %v367, 16
    %v421 = vpop.permute.xlu0 %420
    %422 = vrot.lane.b32.xlu0 %v371, 16
    %v423 = vpop.permute.xlu0 %422
    %vm424 = vcmp.lt.s32.totalorder %v279, 16
    %v425 = vsel %vm424, %v401, %v413
    %v426 = vsel %vm424, %v403, %v415
    %v427 = vsel %vm424, %v405, %v417
    %v428 = vsel %vm424, %v407, %v419
    %v429 = vsel %vm424, %v409, %v421
    %v430 = vsel %vm424, %v411, %v423
    %v431 = vsel %vm424, %v389, %v401
    %v432 = vsel %vm424, %v391, %v403
    %v433 = vsel %vm424, %v393, %v405
    %v434 = vsel %vm424, %v395, %v407
    %v435 = vsel %vm424, %v397, %v409
    %v436 = vsel %vm424, %v399, %v411
    %v437 = vsel %vm424, %v377, %v389
    %v438 = vsel %vm424, %v379, %v391
    %v439 = vsel %vm424, %v381, %v393
    %v440 = vsel %vm424, %v383, %v395
    %v441 = vsel %vm424, %v385, %v397
    %v442 = vsel %vm424, %v387, %v399
    %v443 = vsel %vm424, %v413, %v377
    %v444 = vsel %vm424, %v415, %v379
    %v445 = vsel %vm424, %v417, %v381
    %v446 = vsel %vm424, %v419, %v383
    %v447 = vsel %vm424, %v421, %v385
    %v448 = vsel %vm424, %v423, %v387
    %v450 = vlaneseq
    %v451 = vshrl.u32 %v450, 7
    %v452 = vsub.s32 0, %v451
    %v453 = vrot.slane %v373, %v452
    %v454 = vlaneseq
    %v455 = vshrl.u32 %v454, 7
    %v456 = vsub.s32 1, %v455
    %v457 = vrot.slane %v373, %v456
    %v458 = vlaneseq
    %v459 = vshrl.u32 %v458, 7
    %v460 = vsub.s32 2, %v459
    %v461 = vrot.slane %v373, %v460
    %v462 = vlaneseq
    %v463 = vshrl.u32 %v462, 7
    %v464 = vsub.s32 3, %v463
    %v465 = vrot.slane %v373, %v464
    %v470 = vmul.f32 %v443, %v453
    %v471 = vmul.f32 %v437, %v457
    %v472 = vmul.f32 %v431, %v461
    %v473 = vmul.f32 %v425, %v465
    %v474 = vmul.f32 %v444, %v453
    %v475 = vmul.f32 %v438, %v457
    %v476 = vmul.f32 %v432, %v461
    %v477 = vmul.f32 %v426, %v465
    %v478 = vmul.f32 %v445, %v453
    %v479 = vmul.f32 %v439, %v457
    %v480 = vmul.f32 %v433, %v461
    %v481 = vmul.f32 %v427, %v465
    %v482 = vmul.f32 %v446, %v453
    %v483 = vmul.f32 %v440, %v457
    %v484 = vmul.f32 %v434, %v461
    %v485 = vmul.f32 %v428, %v465
    %v486 = vmul.f32 %v447, %v453
    %v487 = vmul.f32 %v441, %v457
    %v488 = vmul.f32 %v435, %v461
    %v489 = vmul.f32 %v429, %v465
    %v490 = vmul.f32 %v448, %v453
    %v491 = vmul.f32 %v442, %v457
    %v492 = vmul.f32 %v436, %v461
    %v493 = vmul.f32 %v430, %v465
    %494 = vrot.lane.b32.xlu0 %v310, 112
    %v495 = vpop.permute.xlu0 %494
    %496 = vrot.lane.b32.xlu0 %v314, 112
    %v497 = vpop.permute.xlu0 %496
    %498 = vrot.lane.b32.xlu0 %v251, 112
    %v499 = vpop.permute.xlu0 %498
    %500 = vrot.lane.b32.xlu0 %v255, 112
    %v501 = vpop.permute.xlu0 %500
    %502 = vrot.lane.b32.xlu0 %v364, 112
    %v503 = vpop.permute.xlu0 %502
    %504 = vrot.lane.b32.xlu0 %v368, 112
    %v505 = vpop.permute.xlu0 %504
    %506 = vrot.lane.b32.xlu0 %v311, 112
    %v507 = vpop.permute.xlu0 %506
    %508 = vrot.lane.b32.xlu0 %v315, 112
    %v509 = vpop.permute.xlu0 %508
    %510 = vrot.lane.b32.xlu0 %v252, 112
    %v511 = vpop.permute.xlu0 %510
    %512 = vrot.lane.b32.xlu0 %v256, 112
    %v513 = vpop.permute.xlu0 %512
    %514 = vrot.lane.b32.xlu0 %v365, 112
    %v515 = vpop.permute.xlu0 %514
    %516 = vrot.lane.b32.xlu0 %v369, 112
    %v517 = vpop.permute.xlu0 %516
    %518 = vrot.lane.b32.xlu0 %v312, 112
    %v519 = vpop.permute.xlu0 %518
    %520 = vrot.lane.b32.xlu0 %v316, 112
    %v521 = vpop.permute.xlu0 %520
    %522 = vrot.lane.b32.xlu0 %v253, 112
    %v523 = vpop.permute.xlu0 %522
    %524 = vrot.lane.b32.xlu0 %v257, 112
    %v525 = vpop.permute.xlu0 %524
    %526 = vrot.lane.b32.xlu0 %v366, 112
    %v527 = vpop.permute.xlu0 %526
    %528 = vrot.lane.b32.xlu0 %v370, 112
    %v529 = vpop.permute.xlu0 %528
    %530 = vrot.lane.b32.xlu0 %v313, 112
    %v531 = vpop.permute.xlu0 %530
    %532 = vrot.lane.b32.xlu0 %v317, 112
    %v533 = vpop.permute.xlu0 %532
    %534 = vrot.lane.b32.xlu0 %v254, 112
    %v535 = vpop.permute.xlu0 %534
    %536 = vrot.lane.b32.xlu0 %v258, 112
    %v537 = vpop.permute.xlu0 %536
    %538 = vrot.lane.b32.xlu0 %v367, 112
    %v539 = vpop.permute.xlu0 %538
    %540 = vrot.lane.b32.xlu0 %v371, 112
    %v541 = vpop.permute.xlu0 %540
    %vm542 = vcmp.lt.s32.totalorder %v279, 112
    %v543 = vsel %vm542, %v519, %v531
    %v544 = vsel %vm542, %v521, %v533
    %v545 = vsel %vm542, %v523, %v535
    %v546 = vsel %vm542, %v525, %v537
    %v547 = vsel %vm542, %v527, %v539
    %v548 = vsel %vm542, %v529, %v541
    %v549 = vsel %vm542, %v507, %v519
    %v550 = vsel %vm542, %v509, %v521
    %v551 = vsel %vm542, %v511, %v523
    %v552 = vsel %vm542, %v513, %v525
    %v553 = vsel %vm542, %v515, %v527
    %v554 = vsel %vm542, %v517, %v529
    %v555 = vsel %vm542, %v495, %v507
    %v556 = vsel %vm542, %v497, %v509
    %v557 = vsel %vm542, %v499, %v511
    %v558 = vsel %vm542, %v501, %v513
    %v559 = vsel %vm542, %v503, %v515
    %v560 = vsel %vm542, %v505, %v517
    %v561 = vsel %vm542, %v531, %v495
    %v562 = vsel %vm542, %v533, %v497
    %v563 = vsel %vm542, %v535, %v499
    %v564 = vsel %vm542, %v537, %v501
    %v565 = vsel %vm542, %v539, %v503
    %v566 = vsel %vm542, %v541, %v505
    %v568 = vlaneseq
    %v569 = vshrl.u32 %v568, 7
    %v570 = vsub.s32 0, %v569
    %v571 = vrot.slane %v375, %v570
    %v572 = vlaneseq
    %v573 = vshrl.u32 %v572, 7
    %v574 = vsub.s32 1, %v573
    %v575 = vrot.slane %v375, %v574
    %v576 = vlaneseq
    %v577 = vshrl.u32 %v576, 7
    %v578 = vsub.s32 2, %v577
    %v579 = vrot.slane %v375, %v578
    %v580 = vlaneseq
    %v581 = vshrl.u32 %v580, 7
    %v582 = vsub.s32 3, %v581
    %v583 = vrot.slane %v375, %v582
    %v588 = vmul.f32 %v555, %v571
    %v589 = vmul.f32 %v549, %v575
    %v590 = vmul.f32 %v543, %v579
    %v591 = vmul.f32 %v561, %v583
    %v592 = vmul.f32 %v556, %v571
    %v593 = vmul.f32 %v550, %v575
    %v594 = vmul.f32 %v544, %v579
    %v595 = vmul.f32 %v562, %v583
    %v596 = vmul.f32 %v557, %v571
    %v597 = vmul.f32 %v551, %v575
    %v598 = vmul.f32 %v545, %v579
    %v599 = vmul.f32 %v563, %v583
    %v600 = vmul.f32 %v558, %v571
    %v601 = vmul.f32 %v552, %v575
    %v602 = vmul.f32 %v546, %v579
    %v603 = vmul.f32 %v564, %v583
    %v604 = vmul.f32 %v559, %v571
    %v605 = vmul.f32 %v553, %v575
    %v606 = vmul.f32 %v547, %v579
    %v607 = vmul.f32 %v565, %v583
    %v608 = vmul.f32 %v560, %v571
    %v609 = vmul.f32 %v554, %v575
    %v610 = vmul.f32 %v548, %v579
    %v611 = vmul.f32 %v566, %v583
    %v612 = vld [vmem:[%s4] sm:$0xff]
    %v613 = vld [vmem:[%s4 + $0x8] sm:$0xff]
    %v614 = vld [vmem:[%s4 + $0x10] sm:$0xff]
    %v615 = vld [vmem:[%s4 + $0x18] sm:$0xff]
    %v616 = vld [vmem:[%s5] sm:$0xff]
    %v617 = vld [vmem:[%s5 + $0x8] sm:$0xff]
    %619 = vset.pattern.permute.xlu0 0
    %620 = vperm.xlu0 %619, %v616
    %v621 = vpop.permute.xlu0 %620
    %624 = vset.pattern.permute.xlu0 0
    %625 = vperm.xlu0 %624, %v617
    %v626 = vpop.permute.xlu0 %625
    %vm628 = vcmask 130048
    %v630 = vsel %vm628, %v613, 0
    %v633 = vsel %vm628, %v615, 0
    %635 = vmatprep.subr.mxu0 %v601
    %636 = vmatpush1.msra.mxu0 %v600
    %637 = vmatprep.subr.mxu0 %v597
    %638 = vmatpush1.msra.mxu0 %v596
    %639 = vmatprep.subr.mxu0 %v593
    %640 = vmatpush1.msra.mxu0 %v592
    %641 = vmatprep.subr.mxu0 %v589
    %642 = vmatpush1.msra.mxu0 %v588
    %643 = vmatprep.subr.mxu0 %v369
    %644 = vmatpush1.msra.mxu0 %v368
    %645 = vmatprep.subr.mxu0 %v365
    %646 = vmatpush1.msra.mxu0 %v364
    %647 = vmatprep.subr.mxu0 %v256
    %648 = vmatpush1.msra.mxu0 %v255
    %649 = vmatprep.subr.mxu0 %v252
    %650 = vmatpush1.msra.mxu0 %v251
    %651 = vmatprep.subr.mxu0 %v315
    %652 = vmatpush1.msra.mxu0 %v314
    %653 = vmatprep.subr.mxu0 %v311
    %654 = vmatpush1.msra.mxu0 %v310
    %655 = vmatprep.subr.mxu0 %v491
    %656 = vmatpush1.msra.mxu0 %v490
    %657 = vmatprep.subr.mxu0 %v487
    %658 = vmatpush1.msra.mxu0 %v486
    %659 = vmatprep.subr.mxu0 %v483
    %660 = vmatpush1.msra.mxu0 %v482
    %661 = vmatprep.subr.mxu0 %v479
    %662 = vmatpush1.msra.mxu0 %v478
    %663 = vmatprep.subr.mxu0 %v475
    %664 = vmatpush1.msra.mxu0 %v474
    %665 = vmatprep.subr.mxu0 %v471
    %666 = vmatpush1.msra.mxu0 %v470
    %667 = vmatprep.subr.mxu0 0.0
    %668 = vmatpush2.msra.mxu0 0.0
    %669 = vmatprep.subr.mxu0 0.0
    %670 = vmatpush2.msra.mxu0 0.0
    %671 = vmatprep.subr.mxu0 0.0
    %672 = vmatpush2.msra.mxu0 0.0
    %673 = vmatprep.subr.mxu0 0.0
    %674 = vmatpush2.msra.mxu0 0.0
    %675 = vmatprep.subr.mxu0 0.0
    %676 = vmatpush2.msra.mxu0 0.0
    %677 = vmatprep.subr.mxu0 0.0
    %678 = vmatpush2.msra.mxu0 0.0
    %679 = vmatprep.subr.mxu0 0.0
    %680 = vmatpush2.msra.mxu0 0.0
    %681 = vmatprep.subr.mxu0 0.0
    %682 = vmatpush2.msra.mxu0 0.0
    %683 = vmatprep.subr.mxu0 0.0
    %684 = vmatpush2.msra.mxu0 0.0
    %685 = vmatprep.subr.mxu0 0.0
    %686 = vmatpush2.msra.mxu0 0.0
    %687 = vmatprep.subr.mxu0 0.0
    %688 = vmatpush2.msra.mxu0 0.0
    %689 = vmatprep.subr.mxu0 0.0
    %690 = vmatpush2.msra.mxu0 0.0
    %691 = vmatprep.subr.mxu0 0.0
    %692 = vmatpush2.msra.mxu0 0.0
    %693 = vmatprep.subr.mxu0 0.0
    %694 = vmatpush2.msra.mxu0 0.0
    %695 = vmatprep.subr.mxu0 %v609
    %696 = vmatpush2.msra.mxu0 %v608
    %697 = vmatprep.subr.mxu0 %v605
    %698 = vmatpush2.msra.mxu0 %v604
    %699 = vmatprep.mubr.f32.mxu0 %v630
    %700 = vmatmul.mubr.f32.gmra.mxu0 %v612
    %v701 = vpop.f32.mrf.mxu0
    %v702 = vadd.f32 %v621, %v701
    %v703 = vpop.f32.mrf.mxu0
    %v704 = vadd.f32 %v621, %v703
    %705 = vmatprep.mubr.f32.mxu0 %v633
    %706 = vmatmul.mubr.f32.gmra.mxu0 %v614
    %v707 = vpop.f32.mrf.mxu0
    %v708 = vadd.f32 %v626, %v707
    %v709 = vpop.f32.mrf.mxu0
    %v710 = vadd.f32 %v626, %v709
    %711 = vdwg.mxu0
    %712 = vmatprep.subr.mxu0 %v603
    %713 = vmatpush1.msra.mxu0 %v602
    %714 = vmatprep.subr.mxu0 %v599
    %715 = vmatpush1.msra.mxu0 %v598
    %716 = vmatprep.subr.mxu0 %v595
    %717 = vmatpush1.msra.mxu0 %v594
    %718 = vmatprep.subr.mxu0 %v591
    %719 = vmatpush1.msra.mxu0 %v590
    %720 = vmatprep.subr.mxu0 %v371
    %721 = vmatpush1.msra.mxu0 %v370
    %722 = vmatprep.subr.mxu0 %v367
    %723 = vmatpush1.msra.mxu0 %v366
    %724 = vmatprep.subr.mxu0 %v258
    %725 = vmatpush1.msra.mxu0 %v257
    %726 = vmatprep.subr.mxu0 %v254
    %727 = vmatpush1.msra.mxu0 %v253
    %728 = vmatprep.subr.mxu0 %v317
    %729 = vmatpush1.msra.mxu0 %v316
    %730 = vmatprep.subr.mxu0 %v313
    %731 = vmatpush1.msra.mxu0 %v312
    %732 = vmatprep.subr.mxu0 %v493
    %733 = vmatpush1.msra.mxu0 %v492
    %734 = vmatprep.subr.mxu0 %v489
    %735 = vmatpush1.msra.mxu0 %v488
    %736 = vmatprep.subr.mxu0 %v485
    %737 = vmatpush1.msra.mxu0 %v484
    %738 = vmatprep.subr.mxu0 %v481
    %739 = vmatpush1.msra.mxu0 %v480
    %740 = vmatprep.subr.mxu0 %v477
    %741 = vmatpush1.msra.mxu0 %v476
    %742 = vmatprep.subr.mxu0 %v473
    %743 = vmatpush1.msra.mxu0 %v472
    %744 = vmatprep.subr.mxu0 0.0
    %745 = vmatpush2.msra.mxu0 0.0
    %746 = vmatprep.subr.mxu0 0.0
    %747 = vmatpush2.msra.mxu0 0.0
    %748 = vmatprep.subr.mxu0 0.0
    %749 = vmatpush2.msra.mxu0 0.0
    %750 = vmatprep.subr.mxu0 0.0
    %751 = vmatpush2.msra.mxu0 0.0
    %752 = vmatprep.subr.mxu0 0.0
    %753 = vmatpush2.msra.mxu0 0.0
    %754 = vmatprep.subr.mxu0 0.0
    %755 = vmatpush2.msra.mxu0 0.0
    %756 = vmatprep.subr.mxu0 0.0
    %757 = vmatpush2.msra.mxu0 0.0
    %758 = vmatprep.subr.mxu0 0.0
    %759 = vmatpush2.msra.mxu0 0.0
    %760 = vmatprep.subr.mxu0 0.0
    %761 = vmatpush2.msra.mxu0 0.0
    %762 = vmatprep.subr.mxu0 0.0
    %763 = vmatpush2.msra.mxu0 0.0
    %764 = vmatprep.subr.mxu0 0.0
    %765 = vmatpush2.msra.mxu0 0.0
    %766 = vmatprep.subr.mxu0 0.0
    %767 = vmatpush2.msra.mxu0 0.0
    %768 = vmatprep.subr.mxu0 0.0
    %769 = vmatpush2.msra.mxu0 0.0
    %770 = vmatprep.subr.mxu0 0.0
    %771 = vmatpush2.msra.mxu0 0.0
    %772 = vmatprep.subr.mxu0 %v611
    %773 = vmatpush2.msra.mxu0 %v610
    %774 = vmatprep.subr.mxu0 %v607
    %775 = vmatpush2.msra.mxu0 %v606
    %776 = vmatprep.mubr.f32.mxu0 %v630
    %777 = vmatmul.mubr.f32.gmra.mxu0 %v612
    %v778 = vpop.f32.mrf.mxu0
    %v779 = vadd.f32 %v621, %v778
    %v780 = vpop.f32.mrf.mxu0
    %v781 = vadd.f32 %v621, %v780
    %782 = vmatprep.mubr.f32.mxu0 %v633
    %783 = vmatmul.mubr.f32.gmra.mxu0 %v614
    %v784 = vpop.f32.mrf.mxu0
    %v785 = vadd.f32 %v626, %v784
    %v786 = vpop.f32.mrf.mxu0
    %v787 = vadd.f32 %v626, %v786
    %788 = vdwg.mxu0
    %v789 = vmax.f32 %v702, 0.0
    %v790 = vmax.f32 %v704, 0.0
    %v791 = vmax.f32 %v779, 0.0
    %v792 = vmax.f32 %v781, 0.0
    %v793 = vmax.f32 %v708, 0.0
    %v794 = vmax.f32 %v710, 0.0
    %v795 = vmax.f32 %v785, 0.0
    %v796 = vmax.f32 %v787, 0.0
    %v797 = vld [vmem:[%s6] sm:$0xff]
    %v798 = vld [vmem:[%s6 + $0x8] sm:$0xff]
    %v799 = vld [vmem:[%s6 + $0x10] sm:$0xff]
    %v800 = vld [vmem:[%s6 + $0x18] sm:$0xff]
    %v801 = vld [vmem:[%s6 + $0x20] sm:$0xff]
    %v802 = vld [vmem:[%s6 + $0x28] sm:$0xff]
    %v803 = vld [vmem:[%s6 + $0x30] sm:$0xff]
    %v804 = vld [vmem:[%s6 + $0x38] sm:$0xff]
    %v805 = vld [vmem:[%s7] sm:$0xff]
    %v806 = vld [vmem:[%s7 + $0x8] sm:$0xff]
    %v807 = vld [vmem:[%s7 + $0x10] sm:$0xff]
    %v808 = vld [vmem:[%s7 + $0x18] sm:$0xff]
    %v809 = vld [vmem:[%s7 + $0x20] sm:$0xff]
    %v810 = vld [vmem:[%s7 + $0x28] sm:$0xff]
    %v811 = vld [vmem:[%s7 + $0x30] sm:$0xff]
    %v812 = vld [vmem:[%s7 + $0x38] sm:$0xff]
    %814 = vset.pattern.permute.xlu0 0
    %815 = vperm.xlu0 %814, %v805
    %v816 = vpop.permute.xlu0 %815
    %819 = vset.pattern.permute.xlu0 0
    %820 = vperm.xlu0 %819, %v806
    %v821 = vpop.permute.xlu0 %820
    %824 = vset.pattern.permute.xlu0 0
    %825 = vperm.xlu0 %824, %v807
    %v826 = vpop.permute.xlu0 %825
    %829 = vset.pattern.permute.xlu0 0
    %830 = vperm.xlu0 %829, %v808
    %v831 = vpop.permute.xlu0 %830
    %834 = vset.pattern.permute.xlu0 0
    %835 = vperm.xlu0 %834, %v809
    %v836 = vpop.permute.xlu0 %835
    %839 = vset.pattern.permute.xlu0 0
    %840 = vperm.xlu0 %839, %v810
    %v841 = vpop.permute.xlu0 %840
    %844 = vset.pattern.permute.xlu0 0
    %845 = vperm.xlu0 %844, %v811
    %v846 = vpop.permute.xlu0 %845
    %849 = vset.pattern.permute.xlu0 0
    %850 = vperm.xlu0 %849, %v812
    %v851 = vpop.permute.xlu0 %850
    %v854 = vsel %vm628, %v797, 0
    %v857 = vsel %vm628, %v798, 0
    %v860 = vsel %vm628, %v799, 0
    %v863 = vsel %vm628, %v800, 0
    %v866 = vsel %vm628, %v801, 0
    %v869 = vsel %vm628, %v802, 0
    %v872 = vsel %vm628, %v803, 0
    %v875 = vsel %vm628, %v804, 0
    %877 = vmatprep.subr.mxu0 0.0
    %878 = vmatpush1.msra.mxu0 0.0
    %879 = vmatprep.subr.mxu0 0.0
    %880 = vmatpush1.msra.mxu0 0.0
    %881 = vmatprep.subr.mxu0 0.0
    %882 = vmatpush1.msra.mxu0 0.0
    %883 = vmatprep.subr.mxu0 0.0
    %884 = vmatpush1.msra.mxu0 0.0
    %885 = vmatprep.subr.mxu0 0.0
    %886 = vmatpush1.msra.mxu0 0.0
    %887 = vmatprep.subr.mxu0 0.0
    %888 = vmatpush1.msra.mxu0 0.0
    %889 = vmatprep.subr.mxu0 0.0
    %890 = vmatpush1.msra.mxu0 0.0
    %891 = vmatprep.subr.mxu0 0.0
    %892 = vmatpush1.msra.mxu0 0.0
    %893 = vmatprep.subr.mxu0 0.0
    %894 = vmatpush1.msra.mxu0 0.0
    %895 = vmatprep.subr.mxu0 0.0
    %896 = vmatpush1.msra.mxu0 0.0
    %897 = vmatprep.subr.mxu0 0.0
    %898 = vmatpush1.msra.mxu0 0.0
    %899 = vmatprep.subr.mxu0 0.0
    %900 = vmatpush1.msra.mxu0 0.0
    %901 = vmatprep.subr.mxu0 0.0
    %902 = vmatpush1.msra.mxu0 0.0
    %903 = vmatprep.subr.mxu0 0.0
    %904 = vmatpush1.msra.mxu0 0.0
    %905 = vmatprep.subr.mxu0 %v794
    %906 = vmatpush1.msra.mxu0 %v793
    %907 = vmatprep.subr.mxu0 %v790
    %908 = vmatpush1.msra.mxu0 %v789
    %909 = vmatprep.subr.mxu0 0.0
    %910 = vmatpush2.msra.mxu0 0.0
    %911 = vmatprep.subr.mxu0 0.0
    %912 = vmatpush2.msra.mxu0 0.0
    %913 = vmatprep.subr.mxu0 0.0
    %914 = vmatpush2.msra.mxu0 0.0
    %915 = vmatprep.subr.mxu0 0.0
    %916 = vmatpush2.msra.mxu0 0.0
    %917 = vmatprep.subr.mxu0 0.0
    %918 = vmatpush2.msra.mxu0 0.0
    %919 = vmatprep.subr.mxu0 0.0
    %920 = vmatpush2.msra.mxu0 0.0
    %921 = vmatprep.subr.mxu0 0.0
    %922 = vmatpush2.msra.mxu0 0.0
    %923 = vmatprep.subr.mxu0 0.0
    %924 = vmatpush2.msra.mxu0 0.0
    %925 = vmatprep.subr.mxu0 0.0
    %926 = vmatpush2.msra.mxu0 0.0
    %927 = vmatprep.subr.mxu0 0.0
    %928 = vmatpush2.msra.mxu0 0.0
    %929 = vmatprep.subr.mxu0 0.0
    %930 = vmatpush2.msra.mxu0 0.0
    %931 = vmatprep.subr.mxu0 0.0
    %932 = vmatpush2.msra.mxu0 0.0
    %933 = vmatprep.subr.mxu0 0.0
    %934 = vmatpush2.msra.mxu0 0.0
    %935 = vmatprep.subr.mxu0 0.0
    %936 = vmatpush2.msra.mxu0 0.0
    %937 = vmatprep.subr.mxu0 0.0
    %938 = vmatpush2.msra.mxu0 0.0
    %939 = vmatprep.subr.mxu0 0.0
    %940 = vmatpush2.msra.mxu0 0.0
    %941 = vmatprep.mubr.f32.mxu0 0.0
    %942 = vmatmul.mubr.f32.gmra.mxu0 %v854
    %v943 = vpop.f32.mrf.mxu0
    %v944 = vadd.f32 %v816, %v943
    %v945 = vpop.f32.mrf.mxu0
    %v946 = vadd.f32 %v816, %v945
    %947 = vmatprep.mubr.f32.mxu0 0.0
    %948 = vmatmul.mubr.f32.gmra.mxu0 %v857
    %v949 = vpop.f32.mrf.mxu0
    %v950 = vadd.f32 %v821, %v949
    %v951 = vpop.f32.mrf.mxu0
    %v952 = vadd.f32 %v821, %v951
    %953 = vmatprep.mubr.f32.mxu0 0.0
    %954 = vmatmul.mubr.f32.gmra.mxu0 %v860
    %v955 = vpop.f32.mrf.mxu0
    %v956 = vadd.f32 %v826, %v955
    %v957 = vpop.f32.mrf.mxu0
    %v958 = vadd.f32 %v826, %v957
    %959 = vmatprep.mubr.f32.mxu0 0.0
    %960 = vmatmul.mubr.f32.gmra.mxu0 %v863
    %v961 = vpop.f32.mrf.mxu0
    %v962 = vadd.f32 %v831, %v961
    %v963 = vpop.f32.mrf.mxu0
    %v964 = vadd.f32 %v831, %v963
    %965 = vmatprep.mubr.f32.mxu0 0.0
    %966 = vmatmul.mubr.f32.gmra.mxu0 %v866
    %v967 = vpop.f32.mrf.mxu0
    %v968 = vadd.f32 %v836, %v967
    %v969 = vpop.f32.mrf.mxu0
    %v970 = vadd.f32 %v836, %v969
    %971 = vmatprep.mubr.f32.mxu0 0.0
    %972 = vmatmul.mubr.f32.gmra.mxu0 %v869
    %v973 = vpop.f32.mrf.mxu0
    %v974 = vadd.f32 %v841, %v973
    %v975 = vpop.f32.mrf.mxu0
    %v976 = vadd.f32 %v841, %v975
    %977 = vmatprep.mubr.f32.mxu0 0.0
    %978 = vmatmul.mubr.f32.gmra.mxu0 %v872
    %v979 = vpop.f32.mrf.mxu0
    %v980 = vadd.f32 %v846, %v979
    %v981 = vpop.f32.mrf.mxu0
    %v982 = vadd.f32 %v846, %v981
    %983 = vmatprep.mubr.f32.mxu0 0.0
    %984 = vmatmul.mubr.f32.gmra.mxu0 %v875
    %v985 = vpop.f32.mrf.mxu0
    %v986 = vadd.f32 %v851, %v985
    %v987 = vpop.f32.mrf.mxu0
    %v988 = vadd.f32 %v851, %v987
    %989 = vdwg.mxu0
    %990 = vmatprep.subr.mxu0 0.0
    %991 = vmatpush1.msra.mxu0 0.0
    %992 = vmatprep.subr.mxu0 0.0
    %993 = vmatpush1.msra.mxu0 0.0
    %994 = vmatprep.subr.mxu0 0.0
    %995 = vmatpush1.msra.mxu0 0.0
    %996 = vmatprep.subr.mxu0 0.0
    %997 = vmatpush1.msra.mxu0 0.0
    %998 = vmatprep.subr.mxu0 0.0
    %999 = vmatpush1.msra.mxu0 0.0
    %1000 = vmatprep.subr.mxu0 0.0
    %1001 = vmatpush1.msra.mxu0 0.0
    %1002 = vmatprep.subr.mxu0 0.0
    %1003 = vmatpush1.msra.mxu0 0.0
    %1004 = vmatprep.subr.mxu0 0.0
    %1005 = vmatpush1.msra.mxu0 0.0
    %1006 = vmatprep.subr.mxu0 0.0
    %1007 = vmatpush1.msra.mxu0 0.0
    %1008 = vmatprep.subr.mxu0 0.0
    %1009 = vmatpush1.msra.mxu0 0.0
    %1010 = vmatprep.subr.mxu0 0.0
    %1011 = vmatpush1.msra.mxu0 0.0
    %1012 = vmatprep.subr.mxu0 0.0
    %1013 = vmatpush1.msra.mxu0 0.0
    %1014 = vmatprep.subr.mxu0 0.0
    %1015 = vmatpush1.msra.mxu0 0.0
    %1016 = vmatprep.subr.mxu0 0.0
    %1017 = vmatpush1.msra.mxu0 0.0
    %1018 = vmatprep.subr.mxu0 %v796
    %1019 = vmatpush1.msra.mxu0 %v795
    %1020 = vmatprep.subr.mxu0 %v792
    %1021 = vmatpush1.msra.mxu0 %v791
    %1022 = vmatprep.subr.mxu0 0.0
    %1023 = vmatpush2.msra.mxu0 0.0
    %1024 = vmatprep.subr.mxu0 0.0
    %1025 = vmatpush2.msra.mxu0 0.0
    %1026 = vmatprep.subr.mxu0 0.0
    %1027 = vmatpush2.msra.mxu0 0.0
    %1028 = vmatprep.subr.mxu0 0.0
    %1029 = vmatpush2.msra.mxu0 0.0
    %1030 = vmatprep.subr.mxu0 0.0
    %1031 = vmatpush2.msra.mxu0 0.0
    %1032 = vmatprep.subr.mxu0 0.0
    %1033 = vmatpush2.msra.mxu0 0.0
    %1034 = vmatprep.subr.mxu0 0.0
    %1035 = vmatpush2.msra.mxu0 0.0
    %1036 = vmatprep.subr.mxu0 0.0
    %1037 = vmatpush2.msra.mxu0 0.0
    %1038 = vmatprep.subr.mxu0 0.0
    %1039 = vmatpush2.msra.mxu0 0.0
    %1040 = vmatprep.subr.mxu0 0.0
    %1041 = vmatpush2.msra.mxu0 0.0
    %1042 = vmatprep.subr.mxu0 0.0
    %1043 = vmatpush2.msra.mxu0 0.0
    %1044 = vmatprep.subr.mxu0 0.0
    %1045 = vmatpush2.msra.mxu0 0.0
    %1046 = vmatprep.subr.mxu0 0.0
    %1047 = vmatpush2.msra.mxu0 0.0
    %1048 = vmatprep.subr.mxu0 0.0
    %1049 = vmatpush2.msra.mxu0 0.0
    %1050 = vmatprep.subr.mxu0 0.0
    %1051 = vmatpush2.msra.mxu0 0.0
    %1052 = vmatprep.subr.mxu0 0.0
    %1053 = vmatpush2.msra.mxu0 0.0
    %1054 = vmatprep.mubr.f32.mxu0 0.0
    %1055 = vmatmul.mubr.f32.gmra.mxu0 %v854
    %v1056 = vpop.f32.mrf.mxu0
    %v1057 = vadd.f32 %v816, %v1056
    %v1058 = vpop.f32.mrf.mxu0
    %v1059 = vadd.f32 %v816, %v1058
    %1060 = vmatprep.mubr.f32.mxu0 0.0
    %1061 = vmatmul.mubr.f32.gmra.mxu0 %v857
    %v1062 = vpop.f32.mrf.mxu0
    %v1063 = vadd.f32 %v821, %v1062
    %v1064 = vpop.f32.mrf.mxu0
    %v1065 = vadd.f32 %v821, %v1064
    %1066 = vmatprep.mubr.f32.mxu0 0.0
    %1067 = vmatmul.mubr.f32.gmra.mxu0 %v860
    %v1068 = vpop.f32.mrf.mxu0
    %v1069 = vadd.f32 %v826, %v1068
    %v1070 = vpop.f32.mrf.mxu0
    %v1071 = vadd.f32 %v826, %v1070
    %1072 = vmatprep.mubr.f32.mxu0 0.0
    %1073 = vmatmul.mubr.f32.gmra.mxu0 %v863
    %v1074 = vpop.f32.mrf.mxu0
    %v1075 = vadd.f32 %v831, %v1074
    %v1076 = vpop.f32.mrf.mxu0
    %v1077 = vadd.f32 %v831, %v1076
    %1078 = vmatprep.mubr.f32.mxu0 0.0
    %1079 = vmatmul.mubr.f32.gmra.mxu0 %v866
    %v1080 = vpop.f32.mrf.mxu0
    %v1081 = vadd.f32 %v836, %v1080
    %v1082 = vpop.f32.mrf.mxu0
    %v1083 = vadd.f32 %v836, %v1082
    %1084 = vmatprep.mubr.f32.mxu0 0.0
    %1085 = vmatmul.mubr.f32.gmra.mxu0 %v869
    %v1086 = vpop.f32.mrf.mxu0
    %v1087 = vadd.f32 %v841, %v1086
    %v1088 = vpop.f32.mrf.mxu0
    %v1089 = vadd.f32 %v841, %v1088
    %1090 = vmatprep.mubr.f32.mxu0 0.0
    %1091 = vmatmul.mubr.f32.gmra.mxu0 %v872
    %v1092 = vpop.f32.mrf.mxu0
    %v1093 = vadd.f32 %v846, %v1092
    %v1094 = vpop.f32.mrf.mxu0
    %v1095 = vadd.f32 %v846, %v1094
    %1096 = vmatprep.mubr.f32.mxu0 0.0
    %1097 = vmatmul.mubr.f32.gmra.mxu0 %v875
    %v1098 = vpop.f32.mrf.mxu0
    %v1099 = vadd.f32 %v851, %v1098
    %v1100 = vpop.f32.mrf.mxu0
    %v1101 = vadd.f32 %v851, %v1100
    %1102 = vdwg.mxu0
    %v1103 = vadd.f32 %v944, %v44
    %v1104 = vadd.f32 %v946, %v45
    %v1105 = vadd.f32 %v1057, %v46
    %v1106 = vadd.f32 %v1059, %v47
    %v1107 = vadd.f32 %v950, %v48
    %v1108 = vadd.f32 %v952, %v49
    %v1109 = vadd.f32 %v1063, %v50
    %v1110 = vadd.f32 %v1065, %v51
    %v1111 = vadd.f32 %v956, %v52
    %v1112 = vadd.f32 %v958, %v53
    %v1113 = vadd.f32 %v1069, %v54
    %v1114 = vadd.f32 %v1071, %v55
    %v1115 = vadd.f32 %v962, %v56
    %v1116 = vadd.f32 %v964, %v57
    %v1117 = vadd.f32 %v1075, %v58
    %v1118 = vadd.f32 %v1077, %v59
    %v1119 = vadd.f32 %v968, %v60
    %v1120 = vadd.f32 %v970, %v61
    %v1121 = vadd.f32 %v1081, %v62
    %v1122 = vadd.f32 %v1083, %v63
    %v1123 = vadd.f32 %v974, %v64
    %v1124 = vadd.f32 %v976, %v65
    %v1125 = vadd.f32 %v1087, %v66
    %v1126 = vadd.f32 %v1089, %v67
    %v1127 = vadd.f32 %v980, %v68
    %v1128 = vadd.f32 %v982, %v69
    %v1129 = vadd.f32 %v1093, %v70
    %v1130 = vadd.f32 %v1095, %v71
    %v1131 = vadd.f32 %v986, %v72
    %v1132 = vadd.f32 %v988, %v73
    %v1133 = vadd.f32 %v1099, %v74
    %v1134 = vadd.f32 %v1101, %v75
    %v1135 = vmax.f32 %v1103, 0.0
    %v1136 = vmax.f32 %v1104, 0.0
    %v1137 = vmax.f32 %v1105, 0.0
    %v1138 = vmax.f32 %v1106, 0.0
    %v1139 = vmax.f32 %v1107, 0.0
    %v1140 = vmax.f32 %v1108, 0.0
    %v1141 = vmax.f32 %v1109, 0.0
    %v1142 = vmax.f32 %v1110, 0.0
    %v1143 = vmax.f32 %v1111, 0.0
    %v1144 = vmax.f32 %v1112, 0.0
    %v1145 = vmax.f32 %v1113, 0.0
    %v1146 = vmax.f32 %v1114, 0.0
    %v1147 = vmax.f32 %v1115, 0.0
    %v1148 = vmax.f32 %v1116, 0.0
    %v1149 = vmax.f32 %v1117, 0.0
    %v1150 = vmax.f32 %v1118, 0.0
    %v1151 = vmax.f32 %v1119, 0.0
    %v1152 = vmax.f32 %v1120, 0.0
    %v1153 = vmax.f32 %v1121, 0.0
    %v1154 = vmax.f32 %v1122, 0.0
    %v1155 = vmax.f32 %v1123, 0.0
    %v1156 = vmax.f32 %v1124, 0.0
    %v1157 = vmax.f32 %v1125, 0.0
    %v1158 = vmax.f32 %v1126, 0.0
    %v1159 = vmax.f32 %v1127, 0.0
    %v1160 = vmax.f32 %v1128, 0.0
    %v1161 = vmax.f32 %v1129, 0.0
    %v1162 = vmax.f32 %v1130, 0.0
    %v1163 = vmax.f32 %v1131, 0.0
    %v1164 = vmax.f32 %v1132, 0.0
    %v1165 = vmax.f32 %v1133, 0.0
    %v1166 = vmax.f32 %v1134, 0.0
    %1167 = vst [vmem:[#allocation5] sm:$0xff] %v1135
    %1168 = vst [vmem:[#allocation5 + $0x8] sm:$0xff] %v1136
    %1169 = vst [vmem:[#allocation5 + $0x10] sm:$0xff] %v1137
    %1170 = vst [vmem:[#allocation5 + $0x18] sm:$0xff] %v1138
    %1171 = vst [vmem:[#allocation5 + $0x20] sm:$0xff] %v1139
    %1172 = vst [vmem:[#allocation5 + $0x28] sm:$0xff] %v1140
    %1173 = vst [vmem:[#allocation5 + $0x30] sm:$0xff] %v1141
    %1174 = vst [vmem:[#allocation5 + $0x38] sm:$0xff] %v1142
    %1175 = vst [vmem:[#allocation5 + $0x40] sm:$0xff] %v1143
    %1176 = vst [vmem:[#allocation5 + $0x48] sm:$0xff] %v1144
    %1177 = vst [vmem:[#allocation5 + $0x50] sm:$0xff] %v1145
    %1178 = vst [vmem:[#allocation5 + $0x58] sm:$0xff] %v1146
    %1179 = vst [vmem:[#allocation5 + $0x60] sm:$0xff] %v1147
    %1180 = vst [vmem:[#allocation5 + $0x68] sm:$0xff] %v1148
    %1181 = vst [vmem:[#allocation5 + $0x70] sm:$0xff] %v1149
    %1182 = vst [vmem:[#allocation5 + $0x78] sm:$0xff] %v1150
    %1183 = vst [vmem:[#allocation5 + $0x80] sm:$0xff] %v1151
    %1184 = vst [vmem:[#allocation5 + $0x88] sm:$0xff] %v1152
    %1185 = vst [vmem:[#allocation5 + $0x90] sm:$0xff] %v1153
    %1186 = vst [vmem:[#allocation5 + $0x98] sm:$0xff] %v1154
    %1187 = vst [vmem:[#allocation5 + $0xa0] sm:$0xff] %v1155
    %1188 = vst [vmem:[#allocation5 + $0xa8] sm:$0xff] %v1156
    %1189 = vst [vmem:[#allocation5 + $0xb0] sm:$0xff] %v1157
    %1190 = vst [vmem:[#allocation5 + $0xb8] sm:$0xff] %v1158
    %1191 = vst [vmem:[#allocation5 + $0xc0] sm:$0xff] %v1159
    %1192 = vst [vmem:[#allocation5 + $0xc8] sm:$0xff] %v1160
    %1193 = vst [vmem:[#allocation5 + $0xd0] sm:$0xff] %v1161
    %1194 = vst [vmem:[#allocation5 + $0xd8] sm:$0xff] %v1162
    %1195 = vst [vmem:[#allocation5 + $0xe0] sm:$0xff] %v1163
    %1196 = vst [vmem:[#allocation5 + $0xe8] sm:$0xff] %v1164
    %1197 = vst [vmem:[#allocation5 + $0xf0] sm:$0xff] %v1165
    %1198 = vst [vmem:[#allocation5 + $0xf8] sm:$0xff] %v1166
    // Predicated region
    $region38: #{tpu_custom_call.1} parent=1 // pred_check
      _
    $region39: #{tpu_custom_call.1} parent=1 // pred_check_branch
      %1200 = sbr.rel (0) target = $region41
    $region40: #{tpu_custom_call.1} parent=1 // pred_region
      %s1202 = ssub.s32 4096, 4096
      %1203 = vsyncadd [#allocation4], %s1202
      %s1204 = sshll.u32 [#allocation5], 4
      %s1205 = int_to_ptr.vmem [resolvable:$true] %s1204
      %1210 = dma.vmem_to_hbm [thread:$0]  %s1205, 4096, %s8, [#allocation4], 512, 512, 32
    $region41: #{tpu_custom_call.1} parent=1 // pred_fallthru
      _
    // Predicated region
    $region42: #{tpu_custom_call.1} parent=1 // pred_check
      _
    $region43: #{tpu_custom_call.1} parent=1 // pred_check_branch
      %1212 = sbr.rel (0) target = $region45
    $region44: #{tpu_custom_call.1} parent=1 // pred_region
      %1213 = dma.done [#allocation4], 4096
    $region45: #{tpu_custom_call.1} parent=1 // pred_fallthru
      _
    %1214 = vsyncpa [#allocation3], 1
    %1215 = vsyncpa [#allocation4], 1

</llo_original>
